<compile_context>
chip_gen: v5e
topology: v5e:2x2
jax: 0.10.0
libtpu: 0.0.40
codegen_flags: <defaults>
</compile_context>

<pallas_src>
import jax
import jax.numpy as jnp
from jax.experimental import pallas as pl
from jax.experimental.pallas import tpu as pltpu


def _pick_spatial_tile(H, W, C, itemsize, target_bytes=1 << 16):
    """Pick TM (flattened-spatial tile) = whole 2x2 row-pairs, dividing H*W, lane aligned."""
    Ho, Wo = H // 2, W // 2
    rows, rows_o = H * W, Ho * Wo
    base = 2 * W                                   # one input row-pair
    target = max(base, min(rows, target_bytes // max(1, C * itemsize)))
    aligned = []
    for k in range(1, Ho + 1):
        if Ho % k:
            continue
        tm, tmo = base * k, (base * k) // 4
        ok_in = (tm % 128 == 0) or (tm == rows)
        ok_out = (tmo % 128 == 0) or (tmo == rows_o)
        if ok_in and ok_out:
            aligned.append(tm)
    if not aligned:
        return rows, rows // 4                     # full spatial extent is always legal
    geq = [t for t in aligned if t >= target]
    tm = min(geq) if geq else max(aligned)         # smallest aligned tile >= target
    return tm, tm // 4


def fused_pooling_kernel(x_ref, s00_ref, s01_ref, s10_ref, s11_ref,
                         wa_ref, wm_ref, o_ref):
    # x_ref: (1, C, TM)   sXX_ref: (TM, TMo) 0/1 tap selectors   wX_ref: (Co, C)
    # o_ref: (1, Co, TMo)
    x = x_ref[0]                                                    # (C, TM)

    # 2x2 tap gather via exact 0/1 selection matmuls (MXU), f32 accumulate.
    t = jnp.dot(x, s00_ref[...], preferred_element_type=jnp.float32)   # tap (0,0)
    s = t
    m = t
    t = jnp.dot(x, s01_ref[...], preferred_element_type=jnp.float32)   # tap (0,1)
    s = s + t
    m = jnp.maximum(m, t)
    t = jnp.dot(x, s10_ref[...], preferred_element_type=jnp.float32)   # tap (1,0)
    s = s + t
    m = jnp.maximum(m, t)
    t = jnp.dot(x, s11_ref[...], preferred_element_type=jnp.float32)   # tap (1,1)
    s = s + t                                                          # window sum
    m = jnp.maximum(m, t)                                              # window max

    # 1x1 conv as two accumulated dots (no concat, 0.25 folded into wa).
    cd = x.dtype
    out = jnp.dot(wa_ref[...], s.astype(cd), preferred_element_type=jnp.float32)
    out = out + jnp.dot(wm_ref[...], m.astype(cd), preferred_element_type=jnp.float32)
    o_ref[0] = out.astype(o_ref.dtype)


def fused_pooling(x_nchw, conv_weight, *, target_block_bytes=1 << 16):
    """x_nchw: (N, C, H, W), conv_weight: (Co, 2C, 1, 1) -> (N, Co, H//2, W//2)."""
    N, C, H, W = x_nchw.shape
    Co = conv_weight.shape[0]
    assert H % 2 == 0 and W % 2 == 0, "spatial dims must be even for 2x2/stride-2 pooling"
    assert conv_weight.shape == (Co, 2 * C, 1, 1), conv_weight.shape
    Ho, Wo = H // 2, W // 2
    rows, rows_o = H * W, Ho * Wo
    dt = x_nchw.dtype
    itemsize = dt.itemsize
    TM, TMo = _pick_spatial_tile(H, W, C, itemsize, target_block_bytes)

    x_flat = x_nchw.reshape(N, C, rows)            # free reshape, no HBM pass

    # ---- 0/1 tap-selection matrices (block-local, identical for every grid step) ----
    jj = jnp.arange(TMo, dtype=jnp.int32)
    ho_l = jj // Wo
    wo_l = jj % Wo
    ii = jnp.arange(TM, dtype=jnp.int32)[:, None]
    sels = []
    for dh in (0, 1):
        for dw in (0, 1):
            tgt = (2 * ho_l + dh) * W + 2 * wo_l + dw
            sels.append((ii == tgt[None, :]).astype(dt))
    s00, s01, s10, s11 = sels

    # ---- weights: (Co, 2C, 1, 1) -> avg half (pre-scaled by 0.25) and max half ----
    w2d = conv_weight[:, :, 0, 0]                  # (Co, 2C)
    wa = (w2d[:, :C] * 0.25).astype(dt)            # (Co, C)
    wm = w2d[:, C:].astype(dt)                     # (Co, C)

    # ---- explicit VMEM budget (double-buffered operands + f32 temps) ----
    est = 2 * (C * TM + Co * TMo) * itemsize
    est += 2 * 4 * TM * TMo * itemsize + 2 * 2 * Co * C * itemsize
    est += (4 * C * TMo + 2 * Co * TMo) * 4 + C * TM * 4
    vmem_limit = int(min(64 * 2**20, max(32 * 2**20, 2 * est)))

    out_flat = pl.pallas_call(
        fused_pooling_kernel,
        out_shape=jax.ShapeDtypeStruct((N, Co, rows_o), dt),
        grid_spec=pltpu.PrefetchScalarGridSpec(
            num_scalar_prefetch=0,
            grid=(N, rows // TM),
            in_specs=[
                pl.BlockSpec((1, C, TM), lambda n, r: (n, 0, r)),
                pl.BlockSpec((TM, TMo), lambda n, r: (0, 0)),
                pl.BlockSpec((TM, TMo), lambda n, r: (0, 0)),
                pl.BlockSpec((TM, TMo), lambda n, r: (0, 0)),
                pl.BlockSpec((TM, TMo), lambda n, r: (0, 0)),
                pl.BlockSpec((Co, C), lambda n, r: (0, 0)),
                pl.BlockSpec((Co, C), lambda n, r: (0, 0)),
            ],
            out_specs=pl.BlockSpec((1, Co, TMo), lambda n, r: (n, 0, r)),
        ),
        compiler_params=pltpu.CompilerParams(
            dimension_semantics=("parallel", "parallel"),
            vmem_limit_bytes=vmem_limit,
        ),
    )(x_flat, s00, s01, s10, s11, wa, wm)

    return out_flat.reshape(N, Co, Ho, Wo)         # free reshape back to NCHW


def _reference(x_nchw, conv_weight):
    """Pure-JAX reference mirroring the PyTorch forward."""
    N, C, H, W = x_nchw.shape
    Ho, Wo = H // 2, W // 2
    xb = x_nchw.reshape(N, C, Ho, 2, Wo, 2)
    x_ap = xb.mean(axis=(3, 5))
    x_mp = xb.max(axis=(3, 5))
    cat = jnp.concatenate([x_ap, x_mp], axis=1)    # (N, 2C, Ho, Wo)
    w2d = conv_weight[:, :, 0, 0]                  # (Co, 2C)
    return jnp.einsum("oc,nchw->nohw", w2d, cat)


if __name__ == "__main__":
    key = jax.random.PRNGKey(0)
    kx, kw, kx2, kw2 = jax.random.split(key, 4)

    # Shapes implied by the module (nc=4): x (2, 4, 16, 16), conv weight (4, 8, 1, 1).
    N, C, H, W = 2, 4, 16, 16
    x = jax.random.normal(kx, (N, C, H, W), dtype=jnp.float32)
    conv_weight = jax.random.normal(kw, (C, 2 * C, 1, 1), dtype=jnp.float32) * 0.1

    out = jax.block_until_ready(fused_pooling(x, conv_weight))
    ref = _reference(x, conv_weight)
    assert out.shape == (N, C, H // 2, W // 2), out.shape
    # Tolerance sized for the worst case in which the compiler emulates f32 MXU matmuls
    # with a single bf16 pass (tap selection then only bf16-exact); with true f32 matmul
    # emulation the error is ~1e-6.
    err = float(jnp.max(jnp.abs(out - ref)))
    assert jnp.allclose(out, ref, atol=5e-3, rtol=5e-3), err

    # Second case exercising a multi-step spatial grid (TM < H*W).
    N2, C2, H2, W2 = 2, 4, 32, 32
    x2 = jax.random.normal(kx2, (N2, C2, H2, W2), dtype=jnp.float32)
    w2 = jax.random.normal(kw2, (C2, 2 * C2, 1, 1), dtype=jnp.float32) * 0.1
    out2 = jax.block_until_ready(fused_pooling(x2, w2, target_block_bytes=2048))
    ref2 = _reference(x2, w2)
    err2 = float(jnp.max(jnp.abs(out2 - ref2)))
    assert out2.shape == (N2, C2, H2 // 2, W2 // 2), out2.shape
    assert jnp.allclose(out2, ref2, atol=5e-3, rtol=5e-3), err2

    print("KERNEL_OK")
</pallas_src>

<mosaic_0001>
module attributes {stable_mosaic.version = 11 : i64} {
  func.func @fused_pooling_kernel(%arg0: i32, %arg1: i32, %arg2: memref<1x4x256xf32, #tpu.memory_space<vmem>>, %arg3: memref<256x64xf32, #tpu.memory_space<vmem>>, %arg4: memref<256x64xf32, #tpu.memory_space<vmem>>, %arg5: memref<256x64xf32, #tpu.memory_space<vmem>>, %arg6: memref<256x64xf32, #tpu.memory_space<vmem>>, %arg7: memref<4x4xf32, #tpu.memory_space<vmem>>, %arg8: memref<4x4xf32, #tpu.memory_space<vmem>>, %arg9: memref<1x4x64xf32, #tpu.memory_space<vmem>>) attributes {dimension_semantics = [#tpu.dimension_semantics<parallel>, #tpu.dimension_semantics<parallel>], iteration_bounds = array<i64: 2, 1>, scalar_prefetch = 0 : i64, scratch_operands = 0 : i64, tpu.core_type = #tpu.core_type<tc>, window_params = [{transform_indices = @transform_0, window_bounds = array<i64: 1, 4, 256>}, {pipeline_mode = #tpu.pipeline_mode<synchronous>, transform_indices = @transform_1, window_bounds = array<i64: 256, 64>}, {pipeline_mode = #tpu.pipeline_mode<synchronous>, transform_indices = @transform_2, window_bounds = array<i64: 256, 64>}, {pipeline_mode = #tpu.pipeline_mode<synchronous>, transform_indices = @transform_3, window_bounds = array<i64: 256, 64>}, {pipeline_mode = #tpu.pipeline_mode<synchronous>, transform_indices = @transform_4, window_bounds = array<i64: 256, 64>}, {pipeline_mode = #tpu.pipeline_mode<synchronous>, transform_indices = @transform_5, window_bounds = array<i64: 4, 4>}, {pipeline_mode = #tpu.pipeline_mode<synchronous>, transform_indices = @transform_6, window_bounds = array<i64: 4, 4>}, {transform_indices = @transform_7, window_bounds = array<i64: 1, 4, 64>}]} {
    %c0 = arith.constant 0 : index
    %c0_0 = arith.constant 0 : index
    %c0_1 = arith.constant 0 : index
    %0 = vector.load %arg2[%c0, %c0_0, %c0_1] : memref<1x4x256xf32, #tpu.memory_space<vmem>>, vector<1x4x256xf32>
    %1 = vector.shape_cast %0 : vector<1x4x256xf32> to vector<4x256xf32>
    %c0_2 = arith.constant 0 : index
    %c0_3 = arith.constant 0 : index
    %2 = vector.load %arg3[%c0_2, %c0_3] : memref<256x64xf32, #tpu.memory_space<vmem>>, vector<256x64xf32>
    %cst = arith.constant dense<0.000000e+00> : vector<4x64xf32>
    %3 = tpu.matmul %1, %2, %cst {dimension_numbers = #tpu.dot_dimension_numbers<[1], [0], [0], [1], [0, 0, 1, 1], [], []>} : vector<4x256xf32>, vector<256x64xf32>, vector<4x64xf32> -> vector<4x64xf32>
    %c0_4 = arith.constant 0 : index
    %c0_5 = arith.constant 0 : index
    %4 = vector.load %arg4[%c0_4, %c0_5] : memref<256x64xf32, #tpu.memory_space<vmem>>, vector<256x64xf32>
    %cst_6 = arith.constant dense<0.000000e+00> : vector<4x64xf32>
    %5 = tpu.matmul %1, %4, %cst_6 {dimension_numbers = #tpu.dot_dimension_numbers<[1], [0], [0], [1], [0, 0, 1, 1], [], []>} : vector<4x256xf32>, vector<256x64xf32>, vector<4x64xf32> -> vector<4x64xf32>
    %6 = arith.addf %3, %5 : vector<4x64xf32>
    %7 = arith.maximumf %3, %5 : vector<4x64xf32>
    %c0_7 = arith.constant 0 : index
    %c0_8 = arith.constant 0 : index
    %8 = vector.load %arg5[%c0_7, %c0_8] : memref<256x64xf32, #tpu.memory_space<vmem>>, vector<256x64xf32>
    %cst_9 = arith.constant dense<0.000000e+00> : vector<4x64xf32>
    %9 = tpu.matmul %1, %8, %cst_9 {dimension_numbers = #tpu.dot_dimension_numbers<[1], [0], [0], [1], [0, 0, 1, 1], [], []>} : vector<4x256xf32>, vector<256x64xf32>, vector<4x64xf32> -> vector<4x64xf32>
    %10 = arith.addf %6, %9 : vector<4x64xf32>
    %11 = arith.maximumf %7, %9 : vector<4x64xf32>
    %c0_10 = arith.constant 0 : index
    %c0_11 = arith.constant 0 : index
    %12 = vector.load %arg6[%c0_10, %c0_11] : memref<256x64xf32, #tpu.memory_space<vmem>>, vector<256x64xf32>
    %cst_12 = arith.constant dense<0.000000e+00> : vector<4x64xf32>
    %13 = tpu.matmul %1, %12, %cst_12 {dimension_numbers = #tpu.dot_dimension_numbers<[1], [0], [0], [1], [0, 0, 1, 1], [], []>} : vector<4x256xf32>, vector<256x64xf32>, vector<4x64xf32> -> vector<4x64xf32>
    %14 = arith.addf %10, %13 : vector<4x64xf32>
    %15 = arith.maximumf %11, %13 : vector<4x64xf32>
    %c0_13 = arith.constant 0 : index
    %c0_14 = arith.constant 0 : index
    %16 = vector.load %arg7[%c0_13, %c0_14] : memref<4x4xf32, #tpu.memory_space<vmem>>, vector<4x4xf32>
    %cst_15 = arith.constant dense<0.000000e+00> : vector<4x64xf32>
    %17 = tpu.matmul %16, %14, %cst_15 {dimension_numbers = #tpu.dot_dimension_numbers<[1], [0], [0], [1], [0, 0, 1, 1], [], []>} : vector<4x4xf32>, vector<4x64xf32>, vector<4x64xf32> -> vector<4x64xf32>
    %c0_16 = arith.constant 0 : index
    %c0_17 = arith.constant 0 : index
    %18 = vector.load %arg8[%c0_16, %c0_17] : memref<4x4xf32, #tpu.memory_space<vmem>>, vector<4x4xf32>
    %cst_18 = arith.constant dense<0.000000e+00> : vector<4x64xf32>
    %19 = tpu.matmul %18, %15, %cst_18 {dimension_numbers = #tpu.dot_dimension_numbers<[1], [0], [0], [1], [0, 0, 1, 1], [], []>} : vector<4x4xf32>, vector<4x64xf32>, vector<4x64xf32> -> vector<4x64xf32>
    %20 = arith.addf %17, %19 : vector<4x64xf32>
    %c0_19 = arith.constant 0 : index
    %c0_20 = arith.constant 0 : index
    %c0_21 = arith.constant 0 : index
    %21 = vector.load %arg9[%c0_19, %c0_20, %c0_21] : memref<1x4x64xf32, #tpu.memory_space<vmem>>, vector<1x4x64xf32>
    %22 = vector.shape_cast %21 : vector<1x4x64xf32> to vector<4x64xf32>
    %23 = vector.shape_cast %20 : vector<4x64xf32> to vector<1x4x64xf32>
    tpu.vector_store %arg9[%c0_19, %c0_20, %c0_21], %23 {strides = array<i32>} : memref<1x4x64xf32, #tpu.memory_space<vmem>>, vector<1x4x64xf32>,
    return
  }
  func.func @transform_0(%arg0: i32, %arg1: i32) -> (i32, i32, i32) {
    %c0_i32 = arith.constant 0 : i32
    %c0_i32_0 = arith.constant 0 : i32
    return %arg0, %c0_i32, %arg1 : i32, i32, i32
  }
  func.func @transform_1(%arg0: i32, %arg1: i32) -> (i32, i32) {
    %c0_i32 = arith.constant 0 : i32
    %c0_i32_0 = arith.constant 0 : i32
    %c0_i32_1 = arith.constant 0 : i32
    return %c0_i32, %c0_i32_0 : i32, i32
  }
  func.func @transform_2(%arg0: i32, %arg1: i32) -> (i32, i32) {
    %c0_i32 = arith.constant 0 : i32
    %c0_i32_0 = arith.constant 0 : i32
    %c0_i32_1 = arith.constant 0 : i32
    return %c0_i32, %c0_i32_0 : i32, i32
  }
  func.func @transform_3(%arg0: i32, %arg1: i32) -> (i32, i32) {
    %c0_i32 = arith.constant 0 : i32
    %c0_i32_0 = arith.constant 0 : i32
    %c0_i32_1 = arith.constant 0 : i32
    return %c0_i32, %c0_i32_0 : i32, i32
  }
  func.func @transform_4(%arg0: i32, %arg1: i32) -> (i32, i32) {
    %c0_i32 = arith.constant 0 : i32
    %c0_i32_0 = arith.constant 0 : i32
    %c0_i32_1 = arith.constant 0 : i32
    return %c0_i32, %c0_i32_0 : i32, i32
  }
  func.func @transform_5(%arg0: i32, %arg1: i32) -> (i32, i32) {
    %c0_i32 = arith.constant 0 : i32
    %c0_i32_0 = arith.constant 0 : i32
    %c0_i32_1 = arith.constant 0 : i32
    return %c0_i32, %c0_i32_0 : i32, i32
  }
  func.func @transform_6(%arg0: i32, %arg1: i32) -> (i32, i32) {
    %c0_i32 = arith.constant 0 : i32
    %c0_i32_0 = arith.constant 0 : i32
    %c0_i32_1 = arith.constant 0 : i32
    return %c0_i32, %c0_i32_0 : i32, i32
  }
  func.func @transform_7(%arg0: i32, %arg1: i32) -> (i32, i32, i32) {
    %c0_i32 = arith.constant 0 : i32
    %c0_i32_0 = arith.constant 0 : i32
    return %arg0, %c0_i32, %arg1 : i32, i32, i32
  }
}

</mosaic_0001>

<llo_original>
// kernel: tpu_custom_call.1
$region0: #{tpu_custom_call.1}
  #allocation0 [shape = 'u32[]', space=smem, size = 0x4, offset = 0x4, fixed_abs, tag = 'smem constant byte address 0x4 - core index']
  #allocation1 [shape = 'u32[72,128]{1,0:T(1,128)}', space=vmem, size = 0x9000, scoped, tag = 'internal scratch']
  %s0 = inlined_call_operand.vmem [shape: f32[2,4,256], index: 0, kind: input, shape index: {}]
  %s1 = inlined_call_operand.vmem [shape: f32[256,64], index: 1, kind: input, shape index: {}]
  %s2 = inlined_call_operand.vmem [shape: f32[256,64], index: 2, kind: input, shape index: {}]
  %s3 = inlined_call_operand.vmem [shape: f32[256,64], index: 3, kind: input, shape index: {}]
  %s4 = inlined_call_operand.vmem [shape: f32[256,64], index: 4, kind: input, shape index: {}]
  %s5 = inlined_call_operand.vmem [shape: f32[4,4], index: 5, kind: input, shape index: {}]
  %s6 = inlined_call_operand.vmem [shape: f32[4,4], index: 6, kind: input, shape index: {}]
  %s7 = inlined_call_operand.hbm [shape: f32[2,4,64], index: 7, kind: output, shape index: {}]
  %s8 = sld [smem:[#allocation0]]
  $region61: #{tpu_custom_call.1} parent=0
    _
  %s10 = ssub.s32 1, %s8
  %s11 = scalar_select 0, %s10, %s8
  $region1: #{tpu_custom_call.1} parent=0
    #allocation2 [shape = 'u8[4096]{0}', space=vmem, size = 0x1000, scoped, tag = 'output window, operand 0']
    #allocation3 [shape = 's32[2]{0}', space=sflag, size = 0x8, scoped, tag = 'scoped memory for tpu_custom_call.1']
    %12 = vsyncpa [#allocation3], 0
    %s13 = scalar_lea.sflag [#allocation3], 1
    %14 = vsyncpa %s13, 0
    loop: start=0, step=1, limit=4
    $region2: #{tpu_custom_call.1} parent=1 // loop_pre_header
      _
    $region3: #{tpu_custom_call.1} parent=1 // loop_header
      %s16 = sphi 0, %s20
      %p17 = scmp.ge.s32.totalorder %s16, 4
      %s23 = sphi 0, %s35
      %s24 = sphi 0, %s31
      %s25 = sphi 0, %s23
      %s26 = sphi 0, %s24
      %s27 = sphi 0, %s25
      %s28 = sphi 0, %s26
      %s40 = sphi 0, %s42
      %s43 = sphi 0, %s40
      %s44 = sphi 0, %s43
      %s60 = sphi 0, %s44
      %s64 = sphi 0, %s64
      %s66 = sphi 0, %s64
      %s67 = sphi 0, %s66
      %s81 = sphi 0, %s67
      %s85 = sphi 0, %s85
      %s87 = sphi 0, %s85
      %s88 = sphi 0, %s87
      %s102 = sphi 0, %s88
      %s106 = sphi 0, %s106
      %s108 = sphi 0, %s106
      %s109 = sphi 0, %s108
      %s123 = sphi 0, %s109
      %s127 = sphi 0, %s127
      %s129 = sphi 0, %s127
      %s130 = sphi 0, %s129
      %s144 = sphi 0, %s130
      %s148 = sphi 0, %s148
      %s150 = sphi 0, %s148
      %s151 = sphi 0, %s150
      %s165 = sphi 0, %s151
      %s169 = sphi 0, %s169
      %s171 = sphi 0, %s169
      %s172 = sphi 0, %s171
      %s186 = sphi 0, %s172
      %s194 = sphi 0, %s196
      %s197 = sphi 0, %s194
      %s198 = sphi 0, %s197
      %s214 = sphi 0, %s198
    $region4: #{tpu_custom_call.1} parent=1 // loop_header_branch
      %19 = sbr.rel (%p17) target = $region8
    $region5: #{tpu_custom_call.1} parent=1 // loop_body
      %s21 = ssub.s32 %s16, 1
      %s22 = ssub.s32 %s16, 2
      %s29 = sadd.s32 1, %s24
      %p30 = scmp.ge.s32.totalorder %s29, 1
      %s31 = scalar_select %p30, 0, %s29
      %s32 = sadd.s32 1, %s23
      %s33 = scalar_select %p30, %s32, %s23
      %p34 = scmp.ge.s32.totalorder %s33, 2
      %s35 = scalar_select %p34, 0, %s33
      %s36 = ssub.s32 %s23, %s35
      %s37 = ssub.s32 %s24, %s31
      %s38 = sor.u32 %s36, %s37
      %p39 = scmp.eq.s32.totalorder %s38, 0
      %s41 = sadd.s32 %s40, 1
      %s42 = scalar_select %p39, %s40, %s41
      %p45 = pneg %p39
      %p46 = scmp.eq.s32.totalorder %s16, 1
      %p47 = por %p45, %p46
      %p48 = scmp.ne.s32.totalorder %s40, %s43
      %p49 = scmp.eq.s32.totalorder %s16, 0
      %p50 = por %p48, %p49
      %p51 = scmp.ne.s32.totalorder %s40, %s43
      %p52 = scmp.eq.s32.totalorder %s21, 1
      %p53 = por %p51, %p52
      %p54 = scmp.ne.s32.totalorder %s43, %s44
      %p55 = scmp.eq.s32.totalorder %s21, 0
      %p56 = por %p54, %p55
      %p57 = scmp.ne.s32.totalorder %s43, %s44
      %p58 = scmp.eq.s32.totalorder %s22, 1
      %p59 = por %p57, %p58
      %p61 = scmp.ne.s32.totalorder %s44, %s60
      %p62 = scmp.eq.s32.totalorder %s22, 0
      %p63 = por %p61, %p62
      %s65 = sadd.s32 %s64, 1
      %p68 = scmp.eq.s32.totalorder %s16, 1
      %p69 = scmp.ne.s32.totalorder %s64, %s66
      %p70 = scmp.eq.s32.totalorder %s16, 0
      %p71 = por %p69, %p70
      %p72 = scmp.ne.s32.totalorder %s64, %s66
      %p73 = scmp.eq.s32.totalorder %s21, 1
      %p74 = por %p72, %p73
      %p75 = scmp.ne.s32.totalorder %s66, %s67
      %p76 = scmp.eq.s32.totalorder %s21, 0
      %p77 = por %p75, %p76
      %p78 = scmp.ne.s32.totalorder %s66, %s67
      %p79 = scmp.eq.s32.totalorder %s22, 1
      %p80 = por %p78, %p79
      %p82 = scmp.ne.s32.totalorder %s67, %s81
      %p83 = scmp.eq.s32.totalorder %s22, 0
      %p84 = por %p82, %p83
      %s86 = sadd.s32 %s85, 1
      %p89 = scmp.eq.s32.totalorder %s16, 1
      %p90 = scmp.ne.s32.totalorder %s85, %s87
      %p91 = scmp.eq.s32.totalorder %s16, 0
      %p92 = por %p90, %p91
      %p93 = scmp.ne.s32.totalorder %s85, %s87
      %p94 = scmp.eq.s32.totalorder %s21, 1
      %p95 = por %p93, %p94
      %p96 = scmp.ne.s32.totalorder %s87, %s88
      %p97 = scmp.eq.s32.totalorder %s21, 0
      %p98 = por %p96, %p97
      %p99 = scmp.ne.s32.totalorder %s87, %s88
      %p100 = scmp.eq.s32.totalorder %s22, 1
      %p101 = por %p99, %p100
      %p103 = scmp.ne.s32.totalorder %s88, %s102
      %p104 = scmp.eq.s32.totalorder %s22, 0
      %p105 = por %p103, %p104
      %s107 = sadd.s32 %s106, 1
      %p110 = scmp.eq.s32.totalorder %s16, 1
      %p111 = scmp.ne.s32.totalorder %s106, %s108
      %p112 = scmp.eq.s32.totalorder %s16, 0
      %p113 = por %p111, %p112
      %p114 = scmp.ne.s32.totalorder %s106, %s108
      %p115 = scmp.eq.s32.totalorder %s21, 1
      %p116 = por %p114, %p115
      %p117 = scmp.ne.s32.totalorder %s108, %s109
      %p118 = scmp.eq.s32.totalorder %s21, 0
      %p119 = por %p117, %p118
      %p120 = scmp.ne.s32.totalorder %s108, %s109
      %p121 = scmp.eq.s32.totalorder %s22, 1
      %p122 = por %p120, %p121
      %p124 = scmp.ne.s32.totalorder %s109, %s123
      %p125 = scmp.eq.s32.totalorder %s22, 0
      %p126 = por %p124, %p125
      %s128 = sadd.s32 %s127, 1
      %p131 = scmp.eq.s32.totalorder %s16, 1
      %p132 = scmp.ne.s32.totalorder %s127, %s129
      %p133 = scmp.eq.s32.totalorder %s16, 0
      %p134 = por %p132, %p133
      %p135 = scmp.ne.s32.totalorder %s127, %s129
      %p136 = scmp.eq.s32.totalorder %s21, 1
      %p137 = por %p135, %p136
      %p138 = scmp.ne.s32.totalorder %s129, %s130
      %p139 = scmp.eq.s32.totalorder %s21, 0
      %p140 = por %p138, %p139
      %p141 = scmp.ne.s32.totalorder %s129, %s130
      %p142 = scmp.eq.s32.totalorder %s22, 1
      %p143 = por %p141, %p142
      %p145 = scmp.ne.s32.totalorder %s130, %s144
      %p146 = scmp.eq.s32.totalorder %s22, 0
      %p147 = por %p145, %p146
      %s149 = sadd.s32 %s148, 1
      %p152 = scmp.eq.s32.totalorder %s16, 1
      %p153 = scmp.ne.s32.totalorder %s148, %s150
      %p154 = scmp.eq.s32.totalorder %s16, 0
      %p155 = por %p153, %p154
      %p156 = scmp.ne.s32.totalorder %s148, %s150
      %p157 = scmp.eq.s32.totalorder %s21, 1
      %p158 = por %p156, %p157
      %p159 = scmp.ne.s32.totalorder %s150, %s151
      %p160 = scmp.eq.s32.totalorder %s21, 0
      %p161 = por %p159, %p160
      %p162 = scmp.ne.s32.totalorder %s150, %s151
      %p163 = scmp.eq.s32.totalorder %s22, 1
      %p164 = por %p162, %p163
      %p166 = scmp.ne.s32.totalorder %s151, %s165
      %p167 = scmp.eq.s32.totalorder %s22, 0
      %p168 = por %p166, %p167
      %s170 = sadd.s32 %s169, 1
      %p173 = scmp.eq.s32.totalorder %s16, 1
      %p174 = scmp.ne.s32.totalorder %s169, %s171
      %p175 = scmp.eq.s32.totalorder %s16, 0
      %p176 = por %p174, %p175
      %p177 = scmp.ne.s32.totalorder %s169, %s171
      %p178 = scmp.eq.s32.totalorder %s21, 1
      %p179 = por %p177, %p178
      %p180 = scmp.ne.s32.totalorder %s171, %s172
      %p181 = scmp.eq.s32.totalorder %s21, 0
      %p182 = por %p180, %p181
      %p183 = scmp.ne.s32.totalorder %s171, %s172
      %p184 = scmp.eq.s32.totalorder %s22, 1
      %p185 = por %p183, %p184
      %p187 = scmp.ne.s32.totalorder %s172, %s186
      %p188 = scmp.eq.s32.totalorder %s22, 0
      %p189 = por %p187, %p188
      %s190 = ssub.s32 %s23, %s35
      %s191 = ssub.s32 %s24, %s31
      %s192 = sor.u32 %s190, %s191
      %p193 = scmp.eq.s32.totalorder %s192, 0
      %s195 = sadd.s32 %s194, 1
      %s196 = scalar_select %p193, %s194, %s195
      %p199 = pneg %p193
      %p200 = scmp.eq.s32.totalorder %s16, 1
      %p201 = por %p199, %p200
      %p202 = scmp.ne.s32.totalorder %s194, %s197
      %p203 = scmp.eq.s32.totalorder %s16, 0
      %p204 = por %p202, %p203
      %p205 = scmp.ne.s32.totalorder %s194, %s197
      %p206 = scmp.eq.s32.totalorder %s21, 1
      %p207 = por %p205, %p206
      %p208 = scmp.ne.s32.totalorder %s197, %s198
      %p209 = scmp.eq.s32.totalorder %s21, 0
      %p210 = por %p208, %p209
      %p211 = scmp.ne.s32.totalorder %s197, %s198
      %p212 = scmp.eq.s32.totalorder %s22, 1
      %p213 = por %p211, %p212
      %p215 = scmp.ne.s32.totalorder %s198, %s214
      %p216 = scmp.eq.s32.totalorder %s22, 0
      %p217 = por %p215, %p216
      %p218 = scmp.le.s32.totalorder 1, %s16
      %p219 = scmp.lt.s32.totalorder %s16, 3
      %p220 = pnand %p218, %p219
      %p221 = pneg %p220
      // Predicated region
      $region9: #{tpu_custom_call.1} parent=5 // pred_check
        _
      $region10: #{tpu_custom_call.1} parent=5 // pred_check_branch
        %223 = sbr.rel (%p220) target = $region12
      $region11: #{tpu_custom_call.1} parent=5 // pred_region
        %s224 = ssub.s32 %s16, 1
        // Predicated region
        $region13: #{tpu_custom_call.1} parent=11 // pred_check
          %p225 = pneg %p77
        $region14: #{tpu_custom_call.1} parent=11 // pred_check_branch
          %227 = sbr.rel (%p225) target = $region16
        $region15: #{tpu_custom_call.1} parent=11 // pred_region
          _
        $region16: #{tpu_custom_call.1} parent=11 // pred_fallthru
          _
        // Predicated region
        $region17: #{tpu_custom_call.1} parent=11 // pred_check
          %p228 = pneg %p98
        $region18: #{tpu_custom_call.1} parent=11 // pred_check_branch
          %230 = sbr.rel (%p228) target = $region20
        $region19: #{tpu_custom_call.1} parent=11 // pred_region
          _
        $region20: #{tpu_custom_call.1} parent=11 // pred_fallthru
          _
        // Predicated region
        $region21: #{tpu_custom_call.1} parent=11 // pred_check
          %p231 = pneg %p119
        $region22: #{tpu_custom_call.1} parent=11 // pred_check_branch
          %233 = sbr.rel (%p231) target = $region24
        $region23: #{tpu_custom_call.1} parent=11 // pred_region
          _
        $region24: #{tpu_custom_call.1} parent=11 // pred_fallthru
          _
        // Predicated region
        $region25: #{tpu_custom_call.1} parent=11 // pred_check
          %p234 = pneg %p140
        $region26: #{tpu_custom_call.1} parent=11 // pred_check_branch
          %236 = sbr.rel (%p234) target = $region28
        $region27: #{tpu_custom_call.1} parent=11 // pred_region
          _
        $region28: #{tpu_custom_call.1} parent=11 // pred_fallthru
          _
        // Predicated region
        $region29: #{tpu_custom_call.1} parent=11 // pred_check
          %p237 = pneg %p161
        $region30: #{tpu_custom_call.1} parent=11 // pred_check_branch
          %239 = sbr.rel (%p237) target = $region32
        $region31: #{tpu_custom_call.1} parent=11 // pred_region
          _
        $region32: #{tpu_custom_call.1} parent=11 // pred_fallthru
          _
        // Predicated region
        $region33: #{tpu_custom_call.1} parent=11 // pred_check
          %p240 = pneg %p182
        $region34: #{tpu_custom_call.1} parent=11 // pred_check_branch
          %242 = sbr.rel (%p240) target = $region36
        $region35: #{tpu_custom_call.1} parent=11 // pred_region
          _
        $region36: #{tpu_custom_call.1} parent=11 // pred_fallthru
          _
      $region12: #{tpu_custom_call.1} parent=5 // pred_fallthru
        _
      %p243 = scmp.lt.s32.totalorder %s16, 2
      // Predicated region
      $region37: #{tpu_custom_call.1} parent=5 // pred_check
        %p244 = pneg %p243
      $region38: #{tpu_custom_call.1} parent=5 // pred_check_branch
        %246 = sbr.rel (%p244) target = $region40
      $region39: #{tpu_custom_call.1} parent=5 // pred_region
        // Predicated region
        $region41: #{tpu_custom_call.1} parent=39 // pred_check
          %p247 = pneg %p50
        $region42: #{tpu_custom_call.1} parent=39 // pred_check_branch
          %249 = sbr.rel (%p247) target = $region44
        $region43: #{tpu_custom_call.1} parent=39 // pred_region
          %s250 = smul.u32 2, %s24
          %p251 = scmp.lt.s32.totalorder %s23, 1
          %s252 = scalar_select %p251, %s23, 1
          %p253 = scmp.lt.s32.totalorder %s250, 1
          %s254 = scalar_select %p253, %s250, 1
          %s255 = smul.addr %s252, 2
          %s256 = sadd.s32 %s254, %s255
          %s257 = smul.addr %s256, 4
          %s258 = scalar_lea.vmem %s0, %s257
          %s259 = smul.u32 2, %s24
        $region44: #{tpu_custom_call.1} parent=39 // pred_fallthru
          _
      $region40: #{tpu_custom_call.1} parent=5 // pred_fallthru
        _
      %p260 = scmp.le.s32.totalorder 1, %s16
      %p261 = scmp.lt.s32.totalorder %s16, 3
      %p262 = pnand %p260, %p261
      %p263 = pneg %p262
      // Predicated region
      $region45: #{tpu_custom_call.1} parent=5 // pred_check
        _
      $region46: #{tpu_custom_call.1} parent=5 // pred_check_branch
        %265 = sbr.rel (%p262) target = $region48
      $region47: #{tpu_custom_call.1} parent=5 // pred_region
        %s266 = ssub.s32 %s16, 1
        %s267 = smul.u32 2, %s26
        %p268 = scmp.lt.s32.totalorder %s25, 1
        %s269 = scalar_select %p268, %s25, 1
        %p270 = scmp.lt.s32.totalorder %s267, 1
        %s271 = scalar_select %p270, %s267, 1
        %s272 = smul.addr %s269, 2
        %s273 = sadd.s32 %s271, %s272
        %s274 = smul.addr %s273, 4
        %s275 = scalar_lea.vmem %s0, %s274
        %p276 = pneg %p56
        %p277 = pneg %p53
        %p278 = pneg %p77
        %p279 = pneg %p74
        %p280 = pneg %p98
        %p281 = pneg %p95
        %p282 = pneg %p119
        %p283 = pneg %p116
        %p284 = pneg %p140
        %p285 = pneg %p137
        %p286 = pneg %p161
        %p287 = pneg %p158
        %p288 = pneg %p182
        %p289 = pneg %p179
        %p290 = pneg %p210
        %p291 = pneg %p207
        %s292 = sand.u32 %s197, 1
        %s293 = scalar_lea.sflag [#allocation3], %s292
        %s294 = sand.u32 %s197, 1
        %s295 = smul.addr %s294, 4
        %s296 = scalar_lea.vmem [#allocation2], %s295
        %s297 = smul.u32 2, %s26
        %p298 = scmp.lt.s32.totalorder %s25, 1
        %s299 = scalar_select %p298, %s25, 1
        %p300 = scmp.lt.s32.totalorder %s297, 1
        %s301 = scalar_select %p300, %s297, 1
        %s302 = smul.addr %s299, 2
        %s303 = sadd.s32 %s301, %s302
        %s304 = smul.addr %s303, 4
        %s305 = scalar_lea.vmem %s0, %s304
        %s306 = smul.u32 2, %s26
        %v307 = vld [vmem:[%s305] sm:$0xff]
        %v308 = vld [vmem:[%s1] sm:$0xff]
        %v309 = vld [vmem:[%s1 + $0x8] sm:$0xff]
        %v310 = vld [vmem:[%s1 + $0x10] sm:$0xff]
        %v311 = vld [vmem:[%s1 + $0x18] sm:$0xff]
        %v312 = vld [vmem:[%s1 + $0x20] sm:$0xff]
        %v313 = vld [vmem:[%s1 + $0x28] sm:$0xff]
        %v314 = vld [vmem:[%s1 + $0x30] sm:$0xff]
        %v315 = vld [vmem:[%s1 + $0x38] sm:$0xff]
        %v316 = vld [vmem:[%s1 + $0x40] sm:$0xff]
        %v317 = vld [vmem:[%s1 + $0x48] sm:$0xff]
        %v318 = vld [vmem:[%s1 + $0x50] sm:$0xff]
        %v319 = vld [vmem:[%s1 + $0x58] sm:$0xff]
        %v320 = vld [vmem:[%s1 + $0x60] sm:$0xff]
        %v321 = vld [vmem:[%s1 + $0x68] sm:$0xff]
        %v322 = vld [vmem:[%s1 + $0x70] sm:$0xff]
        %v323 = vld [vmem:[%s1 + $0x78] sm:$0xff]
        %v324 = vld [vmem:[%s1 + $0x80] sm:$0xff]
        %v325 = vld [vmem:[%s1 + $0x88] sm:$0xff]
        %v326 = vld [vmem:[%s1 + $0x90] sm:$0xff]
        %v327 = vld [vmem:[%s1 + $0x98] sm:$0xff]
        %v328 = vld [vmem:[%s1 + $0xa0] sm:$0xff]
        %v329 = vld [vmem:[%s1 + $0xa8] sm:$0xff]
        %v330 = vld [vmem:[%s1 + $0xb0] sm:$0xff]
        %v331 = vld [vmem:[%s1 + $0xb8] sm:$0xff]
        %v332 = vld [vmem:[%s1 + $0xc0] sm:$0xff]
        %v333 = vld [vmem:[%s1 + $0xc8] sm:$0xff]
        %v334 = vld [vmem:[%s1 + $0xd0] sm:$0xff]
        %v335 = vld [vmem:[%s1 + $0xd8] sm:$0xff]
        %v336 = vld [vmem:[%s1 + $0xe0] sm:$0xff]
        %v337 = vld [vmem:[%s1 + $0xe8] sm:$0xff]
        %v338 = vld [vmem:[%s1 + $0xf0] sm:$0xff]
        %v339 = vld [vmem:[%s1 + $0xf8] sm:$0xff]
        %341 = vst [vmem:[#allocation1] ss:$2 sm:$0xff] %v307
        %v342 = vld.sshfl [vmem:[#allocation1] sm:$0xff pattern:$0x75316420]
        %v343 = vld.sshfl [vmem:[#allocation1 + $0x8] sm:$0xff pattern:$0x75316420]
        %346 = vmatpush.msra.mxu0 %v323
        %347 = vmatpush.msra.mxu0 %v322
        %348 = vmatpush.msra.mxu0 %v321
        %349 = vmatpush.msra.mxu0 %v320
        %350 = vmatpush.msra.mxu0 %v319
        %351 = vmatpush.msra.mxu0 %v318
        %352 = vmatpush.msra.mxu0 %v317
        %353 = vmatpush.msra.mxu0 %v316
        %354 = vmatpush.msra.mxu0 %v315
        %355 = vmatpush.msra.mxu0 %v314
        %356 = vmatpush.msra.mxu0 %v313
        %357 = vmatpush.msra.mxu0 %v312
        %358 = vmatpush.msra.mxu0 %v311
        %359 = vmatpush.msra.mxu0 %v310
        %360 = vmatpush.msra.mxu0 %v309
        %361 = vmatpush.msra.mxu0 %v308
        %362 = vmatmul.f32.gmra.mxu0 %v342
        %v363 = vpop.f32.mrf.mxu0
        %v364 = vadd.f32 0.0, %v363
        %365 = vdwg.mxu0
        %366 = vmatpush.msra.mxu0 %v339
        %367 = vmatpush.msra.mxu0 %v338
        %368 = vmatpush.msra.mxu0 %v337
        %369 = vmatpush.msra.mxu0 %v336
        %370 = vmatpush.msra.mxu0 %v335
        %371 = vmatpush.msra.mxu0 %v334
        %372 = vmatpush.msra.mxu0 %v333
        %373 = vmatpush.msra.mxu0 %v332
        %374 = vmatpush.msra.mxu0 %v331
        %375 = vmatpush.msra.mxu0 %v330
        %376 = vmatpush.msra.mxu0 %v329
        %377 = vmatpush.msra.mxu0 %v328
        %378 = vmatpush.msra.mxu0 %v327
        %379 = vmatpush.msra.mxu0 %v326
        %380 = vmatpush.msra.mxu0 %v325
        %381 = vmatpush.msra.mxu0 %v324
        %382 = vmatmul.f32.gmra.mxu0 %v343
        %v383 = vpop.f32.mrf.mxu0
        %v384 = vadd.f32 %v364, %v383
        %385 = vdwg.mxu0
        %v386 = vld [vmem:[%s2] sm:$0xff]
        %v387 = vld [vmem:[%s2 + $0x8] sm:$0xff]
        %v388 = vld [vmem:[%s2 + $0x10] sm:$0xff]
        %v389 = vld [vmem:[%s2 + $0x18] sm:$0xff]
        %v390 = vld [vmem:[%s2 + $0x20] sm:$0xff]
        %v391 = vld [vmem:[%s2 + $0x28] sm:$0xff]
        %v392 = vld [vmem:[%s2 + $0x30] sm:$0xff]
        %v393 = vld [vmem:[%s2 + $0x38] sm:$0xff]
        %v394 = vld [vmem:[%s2 + $0x40] sm:$0xff]
        %v395 = vld [vmem:[%s2 + $0x48] sm:$0xff]
        %v396 = vld [vmem:[%s2 + $0x50] sm:$0xff]
        %v397 = vld [vmem:[%s2 + $0x58] sm:$0xff]
        %v398 = vld [vmem:[%s2 + $0x60] sm:$0xff]
        %v399 = vld [vmem:[%s2 + $0x68] sm:$0xff]
        %v400 = vld [vmem:[%s2 + $0x70] sm:$0xff]
        %v401 = vld [vmem:[%s2 + $0x78] sm:$0xff]
        %v402 = vld [vmem:[%s2 + $0x80] sm:$0xff]
        %v403 = vld [vmem:[%s2 + $0x88] sm:$0xff]
        %v404 = vld [vmem:[%s2 + $0x90] sm:$0xff]
        %v405 = vld [vmem:[%s2 + $0x98] sm:$0xff]
        %v406 = vld [vmem:[%s2 + $0xa0] sm:$0xff]
        %v407 = vld [vmem:[%s2 + $0xa8] sm:$0xff]
        %v408 = vld [vmem:[%s2 + $0xb0] sm:$0xff]
        %v409 = vld [vmem:[%s2 + $0xb8] sm:$0xff]
        %v410 = vld [vmem:[%s2 + $0xc0] sm:$0xff]
        %v411 = vld [vmem:[%s2 + $0xc8] sm:$0xff]
        %v412 = vld [vmem:[%s2 + $0xd0] sm:$0xff]
        %v413 = vld [vmem:[%s2 + $0xd8] sm:$0xff]
        %v414 = vld [vmem:[%s2 + $0xe0] sm:$0xff]
        %v415 = vld [vmem:[%s2 + $0xe8] sm:$0xff]
        %v416 = vld [vmem:[%s2 + $0xf0] sm:$0xff]
        %v417 = vld [vmem:[%s2 + $0xf8] sm:$0xff]
        %418 = vst [vmem:[#allocation1] ss:$2 sm:$0xff] %v307
        %v419 = vld.sshfl [vmem:[#allocation1] sm:$0xff pattern:$0x75316420]
        %v420 = vld.sshfl [vmem:[#allocation1 + $0x8] sm:$0xff pattern:$0x75316420]
        %423 = vmatpush.msra.mxu0 %v401
        %424 = vmatpush.msra.mxu0 %v400
        %425 = vmatpush.msra.mxu0 %v399
        %426 = vmatpush.msra.mxu0 %v398
        %427 = vmatpush.msra.mxu0 %v397
        %428 = vmatpush.msra.mxu0 %v396
        %429 = vmatpush.msra.mxu0 %v395
        %430 = vmatpush.msra.mxu0 %v394
        %431 = vmatpush.msra.mxu0 %v393
        %432 = vmatpush.msra.mxu0 %v392
        %433 = vmatpush.msra.mxu0 %v391
        %434 = vmatpush.msra.mxu0 %v390
        %435 = vmatpush.msra.mxu0 %v389
        %436 = vmatpush.msra.mxu0 %v388
        %437 = vmatpush.msra.mxu0 %v387
        %438 = vmatpush.msra.mxu0 %v386
        %439 = vmatmul.f32.gmra.mxu0 %v419
        %v440 = vpop.f32.mrf.mxu0
        %v441 = vadd.f32 0.0, %v440
        %442 = vdwg.mxu0
        %443 = vmatpush.msra.mxu0 %v417
        %444 = vmatpush.msra.mxu0 %v416
        %445 = vmatpush.msra.mxu0 %v415
        %446 = vmatpush.msra.mxu0 %v414
        %447 = vmatpush.msra.mxu0 %v413
        %448 = vmatpush.msra.mxu0 %v412
        %449 = vmatpush.msra.mxu0 %v411
        %450 = vmatpush.msra.mxu0 %v410
        %451 = vmatpush.msra.mxu0 %v409
        %452 = vmatpush.msra.mxu0 %v408
        %453 = vmatpush.msra.mxu0 %v407
        %454 = vmatpush.msra.mxu0 %v406
        %455 = vmatpush.msra.mxu0 %v405
        %456 = vmatpush.msra.mxu0 %v404
        %457 = vmatpush.msra.mxu0 %v403
        %458 = vmatpush.msra.mxu0 %v402
        %459 = vmatmul.f32.gmra.mxu0 %v420
        %v460 = vpop.f32.mrf.mxu0
        %v461 = vadd.f32 %v441, %v460
        %462 = vdwg.mxu0
        %v463 = vadd.f32 %v384, %v461
        %v464 = vmax.f32 %v384, %v461
        %v465 = vld [vmem:[%s3] sm:$0xff]
        %v466 = vld [vmem:[%s3 + $0x8] sm:$0xff]
        %v467 = vld [vmem:[%s3 + $0x10] sm:$0xff]
        %v468 = vld [vmem:[%s3 + $0x18] sm:$0xff]
        %v469 = vld [vmem:[%s3 + $0x20] sm:$0xff]
        %v470 = vld [vmem:[%s3 + $0x28] sm:$0xff]
        %v471 = vld [vmem:[%s3 + $0x30] sm:$0xff]
        %v472 = vld [vmem:[%s3 + $0x38] sm:$0xff]
        %v473 = vld [vmem:[%s3 + $0x40] sm:$0xff]
        %v474 = vld [vmem:[%s3 + $0x48] sm:$0xff]
        %v475 = vld [vmem:[%s3 + $0x50] sm:$0xff]
        %v476 = vld [vmem:[%s3 + $0x58] sm:$0xff]
        %v477 = vld [vmem:[%s3 + $0x60] sm:$0xff]
        %v478 = vld [vmem:[%s3 + $0x68] sm:$0xff]
        %v479 = vld [vmem:[%s3 + $0x70] sm:$0xff]
        %v480 = vld [vmem:[%s3 + $0x78] sm:$0xff]
        %v481 = vld [vmem:[%s3 + $0x80] sm:$0xff]
        %v482 = vld [vmem:[%s3 + $0x88] sm:$0xff]
        %v483 = vld [vmem:[%s3 + $0x90] sm:$0xff]
        %v484 = vld [vmem:[%s3 + $0x98] sm:$0xff]
        %v485 = vld [vmem:[%s3 + $0xa0] sm:$0xff]
        %v486 = vld [vmem:[%s3 + $0xa8] sm:$0xff]
        %v487 = vld [vmem:[%s3 + $0xb0] sm:$0xff]
        %v488 = vld [vmem:[%s3 + $0xb8] sm:$0xff]
        %v489 = vld [vmem:[%s3 + $0xc0] sm:$0xff]
        %v490 = vld [vmem:[%s3 + $0xc8] sm:$0xff]
        %v491 = vld [vmem:[%s3 + $0xd0] sm:$0xff]
        %v492 = vld [vmem:[%s3 + $0xd8] sm:$0xff]
        %v493 = vld [vmem:[%s3 + $0xe0] sm:$0xff]
        %v494 = vld [vmem:[%s3 + $0xe8] sm:$0xff]
        %v495 = vld [vmem:[%s3 + $0xf0] sm:$0xff]
        %v496 = vld [vmem:[%s3 + $0xf8] sm:$0xff]
        %497 = vst [vmem:[#allocation1] ss:$2 sm:$0xff] %v307
        %v498 = vld.sshfl [vmem:[#allocation1] sm:$0xff pattern:$0x75316420]
        %v499 = vld.sshfl [vmem:[#allocation1 + $0x8] sm:$0xff pattern:$0x75316420]
        %502 = vmatpush.msra.mxu0 %v480
        %503 = vmatpush.msra.mxu0 %v479
        %504 = vmatpush.msra.mxu0 %v478
        %505 = vmatpush.msra.mxu0 %v477
        %506 = vmatpush.msra.mxu0 %v476
        %507 = vmatpush.msra.mxu0 %v475
        %508 = vmatpush.msra.mxu0 %v474
        %509 = vmatpush.msra.mxu0 %v473
        %510 = vmatpush.msra.mxu0 %v472
        %511 = vmatpush.msra.mxu0 %v471
        %512 = vmatpush.msra.mxu0 %v470
        %513 = vmatpush.msra.mxu0 %v469
        %514 = vmatpush.msra.mxu0 %v468
        %515 = vmatpush.msra.mxu0 %v467
        %516 = vmatpush.msra.mxu0 %v466
        %517 = vmatpush.msra.mxu0 %v465
        %518 = vmatmul.f32.gmra.mxu0 %v498
        %v519 = vpop.f32.mrf.mxu0
        %v520 = vadd.f32 0.0, %v519
        %521 = vdwg.mxu0
        %522 = vmatpush.msra.mxu0 %v496
        %523 = vmatpush.msra.mxu0 %v495
        %524 = vmatpush.msra.mxu0 %v494
        %525 = vmatpush.msra.mxu0 %v493
        %526 = vmatpush.msra.mxu0 %v492
        %527 = vmatpush.msra.mxu0 %v491
        %528 = vmatpush.msra.mxu0 %v490
        %529 = vmatpush.msra.mxu0 %v489
        %530 = vmatpush.msra.mxu0 %v488
        %531 = vmatpush.msra.mxu0 %v487
        %532 = vmatpush.msra.mxu0 %v486
        %533 = vmatpush.msra.mxu0 %v485
        %534 = vmatpush.msra.mxu0 %v484
        %535 = vmatpush.msra.mxu0 %v483
        %536 = vmatpush.msra.mxu0 %v482
        %537 = vmatpush.msra.mxu0 %v481
        %538 = vmatmul.f32.gmra.mxu0 %v499
        %v539 = vpop.f32.mrf.mxu0
        %v540 = vadd.f32 %v520, %v539
        %541 = vdwg.mxu0
        %v542 = vadd.f32 %v463, %v540
        %v543 = vmax.f32 %v464, %v540
        %v544 = vld [vmem:[%s4] sm:$0xff]
        %v545 = vld [vmem:[%s4 + $0x8] sm:$0xff]
        %v546 = vld [vmem:[%s4 + $0x10] sm:$0xff]
        %v547 = vld [vmem:[%s4 + $0x18] sm:$0xff]
        %v548 = vld [vmem:[%s4 + $0x20] sm:$0xff]
        %v549 = vld [vmem:[%s4 + $0x28] sm:$0xff]
        %v550 = vld [vmem:[%s4 + $0x30] sm:$0xff]
        %v551 = vld [vmem:[%s4 + $0x38] sm:$0xff]
        %v552 = vld [vmem:[%s4 + $0x40] sm:$0xff]
        %v553 = vld [vmem:[%s4 + $0x48] sm:$0xff]
        %v554 = vld [vmem:[%s4 + $0x50] sm:$0xff]
        %v555 = vld [vmem:[%s4 + $0x58] sm:$0xff]
        %v556 = vld [vmem:[%s4 + $0x60] sm:$0xff]
        %v557 = vld [vmem:[%s4 + $0x68] sm:$0xff]
        %v558 = vld [vmem:[%s4 + $0x70] sm:$0xff]
        %v559 = vld [vmem:[%s4 + $0x78] sm:$0xff]
        %v560 = vld [vmem:[%s4 + $0x80] sm:$0xff]
        %v561 = vld [vmem:[%s4 + $0x88] sm:$0xff]
        %v562 = vld [vmem:[%s4 + $0x90] sm:$0xff]
        %v563 = vld [vmem:[%s4 + $0x98] sm:$0xff]
        %v564 = vld [vmem:[%s4 + $0xa0] sm:$0xff]
        %v565 = vld [vmem:[%s4 + $0xa8] sm:$0xff]
        %v566 = vld [vmem:[%s4 + $0xb0] sm:$0xff]
        %v567 = vld [vmem:[%s4 + $0xb8] sm:$0xff]
        %v568 = vld [vmem:[%s4 + $0xc0] sm:$0xff]
        %v569 = vld [vmem:[%s4 + $0xc8] sm:$0xff]
        %v570 = vld [vmem:[%s4 + $0xd0] sm:$0xff]
        %v571 = vld [vmem:[%s4 + $0xd8] sm:$0xff]
        %v572 = vld [vmem:[%s4 + $0xe0] sm:$0xff]
        %v573 = vld [vmem:[%s4 + $0xe8] sm:$0xff]
        %v574 = vld [vmem:[%s4 + $0xf0] sm:$0xff]
        %v575 = vld [vmem:[%s4 + $0xf8] sm:$0xff]
        %576 = vst [vmem:[#allocation1] ss:$2 sm:$0xff] %v307
        %v577 = vld.sshfl [vmem:[#allocation1] sm:$0xff pattern:$0x75316420]
        %v578 = vld.sshfl [vmem:[#allocation1 + $0x8] sm:$0xff pattern:$0x75316420]
        %581 = vmatpush.msra.mxu0 %v559
        %582 = vmatpush.msra.mxu0 %v558
        %583 = vmatpush.msra.mxu0 %v557
        %584 = vmatpush.msra.mxu0 %v556
        %585 = vmatpush.msra.mxu0 %v555
        %586 = vmatpush.msra.mxu0 %v554
        %587 = vmatpush.msra.mxu0 %v553
        %588 = vmatpush.msra.mxu0 %v552
        %589 = vmatpush.msra.mxu0 %v551
        %590 = vmatpush.msra.mxu0 %v550
        %591 = vmatpush.msra.mxu0 %v549
        %592 = vmatpush.msra.mxu0 %v548
        %593 = vmatpush.msra.mxu0 %v547
        %594 = vmatpush.msra.mxu0 %v546
        %595 = vmatpush.msra.mxu0 %v545
        %596 = vmatpush.msra.mxu0 %v544
        %597 = vmatmul.f32.gmra.mxu0 %v577
        %v598 = vpop.f32.mrf.mxu0
        %v599 = vadd.f32 0.0, %v598
        %600 = vdwg.mxu0
        %601 = vmatpush.msra.mxu0 %v575
        %602 = vmatpush.msra.mxu0 %v574
        %603 = vmatpush.msra.mxu0 %v573
        %604 = vmatpush.msra.mxu0 %v572
        %605 = vmatpush.msra.mxu0 %v571
        %606 = vmatpush.msra.mxu0 %v570
        %607 = vmatpush.msra.mxu0 %v569
        %608 = vmatpush.msra.mxu0 %v568
        %609 = vmatpush.msra.mxu0 %v567
        %610 = vmatpush.msra.mxu0 %v566
        %611 = vmatpush.msra.mxu0 %v565
        %612 = vmatpush.msra.mxu0 %v564
        %613 = vmatpush.msra.mxu0 %v563
        %614 = vmatpush.msra.mxu0 %v562
        %615 = vmatpush.msra.mxu0 %v561
        %616 = vmatpush.msra.mxu0 %v560
        %617 = vmatmul.f32.gmra.mxu0 %v578
        %v618 = vpop.f32.mrf.mxu0
        %v619 = vadd.f32 %v599, %v618
        %620 = vdwg.mxu0
        %v621 = vadd.f32 %v542, %v619
        %v622 = vmax.f32 %v543, %v619
        %v623 = vld [vmem:[%s5] sm:$0xf]
        %v624 = vld [vmem:[%s6] sm:$0xf]
        %vm625 = vcmask 31744
        %v627 = vsel %vm625, %v624, 0
        %vm629 = vcmask 1043456
        %v631 = vsel %vm629, %v622, 0
        %633 = vmatpush.msra.mxu0 0.0
        %634 = vmatpush.msra.mxu0 0.0
        %635 = vmatpush.msra.mxu0 0.0
        %636 = vmatpush.msra.mxu0 0.0
        %637 = vmatpush.msra.mxu0 0.0
        %638 = vmatpush.msra.mxu0 0.0
        %639 = vmatpush.msra.mxu0 0.0
        %640 = vmatpush.msra.mxu0 0.0
        %641 = vmatpush.msra.mxu0 0.0
        %642 = vmatpush.msra.mxu0 0.0
        %643 = vmatpush.msra.mxu0 0.0
        %644 = vmatpush.msra.mxu0 0.0
        %645 = vmatpush.msra.mxu0 0.0
        %646 = vmatpush.msra.mxu0 0.0
        %647 = vmatpush.msra.mxu0 0.0
        %648 = vmatpush.msra.mxu0 %v631
        %649 = vmatmul.f32.gmra.mxu0 %v627
        %v650 = vpop.f32.mrf.mxu0
        %v651 = vadd.f32 0.0, %v650
        %652 = vdwg.mxu0
        %v654 = vsel %vm625, %v623, 0
        %v657 = vsel %vm629, %v621, 0
        %659 = vmatpush.msra.mxu0 0.0
        %660 = vmatpush.msra.mxu0 0.0
        %661 = vmatpush.msra.mxu0 0.0
        %662 = vmatpush.msra.mxu0 0.0
        %663 = vmatpush.msra.mxu0 0.0
        %664 = vmatpush.msra.mxu0 0.0
        %665 = vmatpush.msra.mxu0 0.0
        %666 = vmatpush.msra.mxu0 0.0
        %667 = vmatpush.msra.mxu0 0.0
        %668 = vmatpush.msra.mxu0 0.0
        %669 = vmatpush.msra.mxu0 0.0
        %670 = vmatpush.msra.mxu0 0.0
        %671 = vmatpush.msra.mxu0 0.0
        %672 = vmatpush.msra.mxu0 0.0
        %673 = vmatpush.msra.mxu0 0.0
        %674 = vmatpush.msra.mxu0 %v657
        %675 = vmatmul.f32.gmra.mxu0 %v654
        %v676 = vpop.f32.mrf.mxu0
        %v677 = vadd.f32 %v651, %v676
        %678 = vdwg.mxu0
        %vm679 = vcmask 519168
        %680 = vst.msk [vmem:[%s296] sm:$0xf] %vm679, %v677
        %s681 = sand.u32 %s197, 1
        %s682 = scalar_lea.sflag [#allocation3], %s681
        %s683 = sand.u32 %s197, 1
        %s684 = smul.addr %s683, 4
        %s685 = scalar_lea.vmem [#allocation2], %s684
        // Predicated region
        $region49: #{tpu_custom_call.1} parent=47 // pred_check
          %p686 = pneg %p207
        $region50: #{tpu_custom_call.1} parent=47 // pred_check_branch
          %688 = sbr.rel (%p686) target = $region52
        $region51: #{tpu_custom_call.1} parent=47 // pred_region
          %690 = vsyncadd %s682, 0
          %s691 = sadd.s32 %s26, %s25
          %s692 = smul.addr %s691, 4
          %s693 = scalar_lea.hbm %s7, %s692
          %s695 = sshll.u32 %s685, 4
          %s696 = int_to_ptr.vmem [resolvable:$true] %s695
          %s697 = sshll.u32 %s693, 4
          %s698 = int_to_ptr.hbm [resolvable:$true] %s697
          %700 = dma.vmem_to_hbm [thread:$0]  %s696, 64, %s698, %s682
        $region52: #{tpu_custom_call.1} parent=47 // pred_fallthru
          _
      $region48: #{tpu_custom_call.1} parent=5 // pred_fallthru
        _
      %p701 = scmp.le.s32.totalorder 2, %s16
      // Predicated region
      $region53: #{tpu_custom_call.1} parent=5 // pred_check
        %p702 = pneg %p701
      $region54: #{tpu_custom_call.1} parent=5 // pred_check_branch
        %704 = sbr.rel (%p702) target = $region56
      $region55: #{tpu_custom_call.1} parent=5 // pred_region
        %s705 = ssub.s32 %s16, 2
        // Predicated region
        $region57: #{tpu_custom_call.1} parent=55 // pred_check
          %p706 = pneg %p213
        $region58: #{tpu_custom_call.1} parent=55 // pred_check_branch
          %708 = sbr.rel (%p706) target = $region60
        $region59: #{tpu_custom_call.1} parent=55 // pred_region
          %s709 = sand.u32 %s198, 1
          %s710 = scalar_lea.sflag [#allocation3], %s709
          %s711 = sand.u32 %s198, 1
          %s712 = smul.addr %s711, 4
          %s713 = scalar_lea.vmem [#allocation2], %s712
          %715 = dma.done %s710, 64
        $region60: #{tpu_custom_call.1} parent=55 // pred_fallthru
          _
      $region56: #{tpu_custom_call.1} parent=5 // pred_fallthru
        _
    $region6: #{tpu_custom_call.1} parent=1 // loop_footer
      %s20 = sadd.s32 1, %s16
    $region7: #{tpu_custom_call.1} parent=1 // loop_footer_branch
      %15 = sbr.rel target = $region3
    $region8: #{tpu_custom_call.1} parent=1 // loop_exit
      _
    %716 = vsyncpa [#allocation3], 1
    %s717 = scalar_lea.sflag [#allocation3], 1
    %718 = vsyncpa %s717, 1

</llo_original>
